<compile_context>
chip_gen: v5e
topology: v5e:2x2
jax: 0.10.0
libtpu: 0.0.40
codegen_flags: <defaults>
</compile_context>

<pallas_src>
import jax
import jax.numpy as jnp
from jax.experimental import pallas as pl
from jax.experimental.pallas import tpu as pltpu


def _power_law3_kernel(d_ref, o_ref):
    x = d_ref[...]
    y = jnp.log(x)
    maxv = jnp.asarray(jnp.finfo(x.dtype).max, x.dtype)
    minv = jnp.asarray(jnp.finfo(x.dtype).min, x.dtype)
    # torch.nan_to_num(max): NaN -> max (explicit), +inf -> max, -inf -> min (defaults).
    # clip handles both infinities; the where handles NaN.
    y = jnp.where(jnp.isnan(y), maxv, jnp.clip(y, minv, maxv))
    # NOTE: -3 * finfo.max overflows to -inf; this matches PyTorch exactly.
    o_ref[...] = jnp.asarray(-3.0, x.dtype) * y


_LANE_CANDIDATES = (4096, 2048, 1024, 512, 256, 128)


def _tile_config(itemsize):
    """Generation-aware (tile bytes, vmem limit, sublane multiple, two-core?)."""
    try:
        kind = jax.devices()[0].device_kind.lower()
    except Exception:  # pragma: no cover - defensive; fall back to conservative tiling
        kind = ""
    if "v7" in kind or "7x" in kind:
        # v7x: 3.2 TB/s HBM -> bigger tiles to amortize per-step overhead.
        # Resident = 2x(in)+2x(out) = ~16 MiB; set the scoped limit explicitly.
        target_tile_bytes = 4 * 1024 * 1024
        vmem_limit = 40 * 1024 * 1024
        two_cores = True
    else:
        # v5e/v6e: 2 MiB tiles are already at the measured roofline plateau and
        # 4x2 MiB resident stays under v5e's 16 MiB scoped-VMEM default.
        target_tile_bytes = 2 * 1024 * 1024
        vmem_limit = None
        two_cores = False
    # Sub-32-bit dtypes pack rows along sublanes: f32 -> 8, bf16 -> 16, int8/fp8 -> 32.
    sublane = max(8, 32 // itemsize)
    return target_tile_bytes, vmem_limit, sublane, two_cores


def fixed_power_law3(d):
    """d: (B, ...) float array -> (B, 1, ...). Elementwise -3*nan_to_num(log(d))."""
    out_shape = (d.shape[0], 1) + d.shape[1:]
    n = d.size
    itemsize = jnp.dtype(d.dtype).itemsize
    target_tile_bytes, vmem_limit, sublane, two_cores = _tile_config(itemsize)

    flat = d.reshape(-1)

    # Lane-dense last dim: widest candidate that divides n exactly; otherwise
    # fall back to lane=128 and pad only to the next multiple of 128 (the rare
    # path).  log(1)=0, so padding never hits the NaN/inf branches.
    lane = next((c for c in _LANE_CANDIDATES if n % c == 0), None)
    if lane is None:
        lane = 128
        n_lane_padded = pl.cdiv(n, lane) * lane
        flat = jnp.pad(flat, (0, n_lane_padded - n), constant_values=1.0)
    else:
        n_lane_padded = n
    n_rows = n_lane_padded // lane

    rows_per_tile = max(
        sublane, (target_tile_bytes // (lane * itemsize)) // sublane * sublane
    )

    if n_rows <= rows_per_tile:
        # Single tile: block equals the full first dim (no (8,128) divisibility needed).
        row_block, grid_rows = n_rows, 1
    else:
        grid_rows = pl.cdiv(n_rows, rows_per_tile)
        if two_cores and grid_rows % 2 == 1:
            grid_rows += 1  # keep both v7x TensorCores equally fed
        # Balance rows across grid steps, sublane-aligned; Pallas masks the
        # ragged last block (garbage tail reads are neutralized by log +
        # nan_to_num, and the corresponding stores are dropped).
        row_block = pl.cdiv(pl.cdiv(n_rows, grid_rows), sublane) * sublane
        grid_rows = pl.cdiv(n_rows, row_block)

    x2d = flat.reshape(n_rows, lane)

    out2d = pl.pallas_call(
        _power_law3_kernel,
        out_shape=jax.ShapeDtypeStruct((n_rows, lane), d.dtype),
        grid=(grid_rows,),
        in_specs=[pl.BlockSpec((row_block, lane), lambda i: (i, 0))],
        out_specs=pl.BlockSpec((row_block, lane), lambda i: (i, 0)),
        compiler_params=pltpu.CompilerParams(
            dimension_semantics=("parallel",),
            vmem_limit_bytes=vmem_limit,
        ),
        cost_estimate=pl.CostEstimate(
            flops=4 * n_lane_padded,        # compare + select + clip + scale
            transcendentals=n_lane_padded,  # log
            bytes_accessed=2 * n_lane_padded * itemsize,
        ),
    )(x2d)

    out_flat = out2d.reshape(-1)
    if n_lane_padded != n:
        out_flat = out_flat[:n]
    # unsqueeze(1): metadata-only reshape in the wrapper.
    return out_flat.reshape(out_shape)


def _reference(d):
    ref = jnp.log(d)
    maxv = jnp.finfo(d.dtype).max
    minv = jnp.finfo(d.dtype).min
    ref = jnp.where(jnp.isnan(ref), maxv, ref)
    ref = jnp.where(ref == jnp.inf, maxv, ref)
    ref = jnp.where(ref == -jnp.inf, minv, ref)
    ref = -3.0 * ref
    return jnp.expand_dims(ref, 1)


if __name__ == "__main__":
    key = jax.random.PRNGKey(0)

    # Case 1: lane-exact shape (n = 512 divides a lane candidate; no padding).
    B, H, W = 2, 16, 16
    d = jax.random.uniform(key, (B, H, W), dtype=jnp.float32, minval=0.1, maxval=10.0)
    d = d.at[0, 0, 0].set(0.0)    # log -> -inf -> finfo.min -> -3*min = +inf
    d = d.at[1, 3, 5].set(-1.0)   # log -> NaN  -> finfo.max -> -3*max = -inf

    out = fixed_power_law3(d)
    jax.block_until_ready(out)
    ref = _reference(d)
    assert out.shape == (B, 1, H, W)
    assert jnp.allclose(out, ref, equal_nan=True)

    # Case 2: ragged size (n = 231, not a multiple of 128; minimal lane padding path).
    key2 = jax.random.PRNGKey(1)
    d2 = jax.random.uniform(key2, (3, 7, 11), dtype=jnp.float32, minval=0.1, maxval=10.0)
    d2 = d2.at[2, 0, 0].set(0.0)
    out2 = fixed_power_law3(d2)
    jax.block_until_ready(out2)
    ref2 = _reference(d2)
    assert out2.shape == (3, 1, 7, 11)
    assert jnp.allclose(out2, ref2, equal_nan=True)

    print("KERNEL_OK")
</pallas_src>

<mosaic_0001>
module attributes {stable_mosaic.version = 11 : i64} {
  func.func @_power_law3_kernel(%arg0: i32, %arg1: memref<1x512xf32, #tpu.memory_space<vmem>>, %arg2: memref<1x512xf32, #tpu.memory_space<vmem>>) attributes {dimension_semantics = [#tpu.dimension_semantics<parallel>], iteration_bounds = array<i64: 1>, scalar_prefetch = 0 : i64, scratch_operands = 0 : i64, tpu.core_type = #tpu.core_type<tc>, window_params = [{transform_indices = @transform_0, window_bounds = array<i64: 1, 512>}, {transform_indices = @transform_1, window_bounds = array<i64: 1, 512>}]} {
    %c0 = arith.constant 0 : index
    %c0_0 = arith.constant 0 : index
    %0 = vector.load %arg1[%c0, %c0_0] : memref<1x512xf32, #tpu.memory_space<vmem>>, vector<1x512xf32>
    %1 = math.log %0 : vector<1x512xf32>
    %2 = arith.cmpf one, %1, %1 : vector<1x512xf32>
    %cst = arith.constant -3.40282347E+38 : f32
    %cst_1 = arith.constant 3.40282347E+38 : f32
    %3 = vector.broadcast %cst : f32 to vector<1x512xf32>
    %4 = arith.maximumf %3, %1 : vector<1x512xf32>
    %5 = vector.broadcast %cst_1 : f32 to vector<1x512xf32>
    %6 = arith.minimumf %5, %4 : vector<1x512xf32>
    %cst_2 = arith.constant 3.40282347E+38 : f32
    %7 = vector.broadcast %cst_2 : f32 to vector<1x512xf32>
    %8 = arith.select %2, %7, %6 : vector<1x512xi1>, vector<1x512xf32>
    %cst_3 = arith.constant -3.000000e+00 : f32
    %9 = vector.broadcast %cst_3 : f32 to vector<1x512xf32>
    %10 = arith.mulf %9, %8 : vector<1x512xf32>
    %c0_4 = arith.constant 0 : index
    %c0_5 = arith.constant 0 : index
    %11 = vector.load %arg2[%c0_4, %c0_5] : memref<1x512xf32, #tpu.memory_space<vmem>>, vector<1x512xf32>
    tpu.vector_store %arg2[%c0_4, %c0_5], %10 {strides = array<i32>} : memref<1x512xf32, #tpu.memory_space<vmem>>, vector<1x512xf32>,
    return
  }
  func.func @transform_0(%arg0: i32) -> (i32, i32) {
    %c0_i32 = arith.constant 0 : i32
    %c0_i32_0 = arith.constant 0 : i32
    return %arg0, %c0_i32 : i32, i32
  }
  func.func @transform_1(%arg0: i32) -> (i32, i32) {
    %c0_i32 = arith.constant 0 : i32
    %c0_i32_0 = arith.constant 0 : i32
    return %arg0, %c0_i32 : i32, i32
  }
}

</mosaic_0001>

<llo_original>
// kernel: tpu_custom_call.1
$region0: #{tpu_custom_call.1}
  #allocation0 [shape = 'u32[]', space=smem, size = 0x4, offset = 0x4, fixed_abs, tag = 'smem constant byte address 0x4 - core index']
  #allocation1 [shape = 'u32[72,128]{1,0:T(1,128)}', space=vmem, size = 0x9000, scoped, tag = 'internal scratch']
  %s0 = inlined_call_operand.hbm [shape: f32[1,512], index: 0, kind: input, shape index: {}]
  %s1 = inlined_call_operand.hbm [shape: f32[1,512], index: 1, kind: output, shape index: {}]
  %s2 = sld [smem:[#allocation0]]
  $region18: #{tpu_custom_call.1} parent=0
    _
  %s4 = ssub.s32 1, %s2
  %s5 = scalar_select 0, %s4, %s2
  $region1: #{tpu_custom_call.1} parent=0
    #allocation2 [shape = 'u8[2048]{0}', space=vmem, size = 0x800, scoped, tag = 'input window, operand 0, single buffered']
    #allocation3 [shape = 's32[1]{0}', space=sflag, size = 0x4, scoped, tag = 'scoped memory for tpu_custom_call.1']
    #allocation4 [shape = 's32[1]{0}', space=sflag, size = 0x4, scoped, tag = 'scoped memory for tpu_custom_call.1']
    #allocation5 [shape = 'u8[2048]{0}', space=vmem, size = 0x800, scoped, tag = 'output window, operand 0, single buffered']
    %6 = vsyncpa [#allocation3], 0
    %7 = vsyncpa [#allocation4], 0
    // Predicated region
    $region2: #{tpu_custom_call.1} parent=1 // pred_check
      _
    $region3: #{tpu_custom_call.1} parent=1 // pred_check_branch
      %9 = sbr.rel (0) target = $region5
    $region4: #{tpu_custom_call.1} parent=1 // pred_region
      %11 = vsyncadd [#allocation3], 0
      %s13 = sshll.u32 %s0, 4
      %s14 = int_to_ptr.hbm [resolvable:$true] %s13
      %s15 = sshll.u32 [#allocation2], 4
      %s16 = int_to_ptr.vmem [resolvable:$true] %s15
      %18 = dma.hbm_to_vmem [thread:$0]  %s14, 64, %s16, [#allocation3]
    $region5: #{tpu_custom_call.1} parent=1 // pred_fallthru
      _
    // Predicated region
    $region6: #{tpu_custom_call.1} parent=1 // pred_check
      _
    $region7: #{tpu_custom_call.1} parent=1 // pred_check_branch
      %20 = sbr.rel (0) target = $region9
    $region8: #{tpu_custom_call.1} parent=1 // pred_region
      %22 = dma.done [#allocation3], 64
    $region9: #{tpu_custom_call.1} parent=1 // pred_fallthru
      _
    %v23 = vld [vmem:[#allocation2] sm:$0xf]
    %v24 = vlog2.pop %v23
    %v25 = vmul.f32 %v24, 0.6931472
    %vm26 = vcmp.ne.f32.partialorder %v25, %v25
    %v27 = vmax.f32 %v25, -3.4028235e+38
    %v28 = vmin.f32 %v27, 3.4028235e+38
    %v29 = vsel %vm26, 3.4028235e+38, %v28
    %v30 = vmul.f32 %v29, -3.0
    %v31 = vlaneseq
    %vm32 = vcmp.ge.s32.totalorder %v31, 0
    %vm33 = vcmp.lt.s32.totalorder %v31, 512
    %vm34 = vmand %vm32, %vm33
    %35 = vst.msk [vmem:[#allocation5] sm:$0xf] %vm34, %v30
    // Predicated region
    $region10: #{tpu_custom_call.1} parent=1 // pred_check
      _
    $region11: #{tpu_custom_call.1} parent=1 // pred_check_branch
      %37 = sbr.rel (0) target = $region13
    $region12: #{tpu_custom_call.1} parent=1 // pred_region
      %39 = vsyncadd [#allocation4], 0
      %s41 = sshll.u32 [#allocation5], 4
      %s42 = int_to_ptr.vmem [resolvable:$true] %s41
      %s43 = sshll.u32 %s1, 4
      %s44 = int_to_ptr.hbm [resolvable:$true] %s43
      %46 = dma.vmem_to_hbm [thread:$0]  %s42, 64, %s44, [#allocation4]
    $region13: #{tpu_custom_call.1} parent=1 // pred_fallthru
      _
    // Predicated region
    $region14: #{tpu_custom_call.1} parent=1 // pred_check
      _
    $region15: #{tpu_custom_call.1} parent=1 // pred_check_branch
      %48 = sbr.rel (0) target = $region17
    $region16: #{tpu_custom_call.1} parent=1 // pred_region
      %50 = dma.done [#allocation4], 64
    $region17: #{tpu_custom_call.1} parent=1 // pred_fallthru
      _
    %51 = vsyncpa [#allocation3], 1
    %52 = vsyncpa [#allocation4], 1

</llo_original>
